<compile_context>
chip_gen: v5e
topology: v5e:2x2
jax: 0.10.0
libtpu: 0.0.40
codegen_flags: <defaults>
</compile_context>

<pallas_src>
import numpy as np
import jax
import jax.numpy as jnp
from jax.experimental import pallas as pl
from jax.experimental.pallas import tpu as pltpu


def rnn_net_kernel(params_ref, x_ref, y_ref):
    """One grid step = one lane-block of examples (clients x batch folded together).

    params_ref: SMEM (4 + T,) f32 = [w_ih, w_hh, b_h, b_fc, w_fc_0 .. w_fc_{T-1}]
                (w_ih / w_hh are the 1x1 RNN weights, b_h = b_ih + b_hh)
    x_ref:      VMEM (T, 8, BL) f32 -- time leading, examples folded on (sublane, lane)
    y_ref:      VMEM (8, BL)    f32 -- lane/sublane-dense output slab
    """
    T = x_ref.shape[0]
    S, BL = y_ref.shape  # (8, block_l)

    # Scalar parameters (cheap SMEM reads), all hoisted before the vector loop.
    w_ih = params_ref[0]
    w_hh = params_ref[1]
    b_h = params_ref[2]
    b_fc = params_ref[3]
    w_fc = [params_ref[4 + t] for t in range(T)]

    # Hoist the scalar->vector splats once (JAX does not CSE broadcast_in_dim).
    w_ih_v = jnp.full((S, BL), w_ih, dtype=jnp.float32)
    w_hh_v = jnp.full((S, BL), w_hh, dtype=jnp.float32)
    b_h_v = jnp.full((S, BL), b_h, dtype=jnp.float32)

    h = jnp.zeros((S, BL), dtype=jnp.float32)       # PyTorch default h0 = 0
    y = jnp.full((S, BL), b_fc, dtype=jnp.float32)  # FC bias folded into accumulator

    # seq_len is small & static (6) and the recurrence is inherently sequential, so
    # unroll over t.  x is read per timestep (not hoisted) to cap vreg pressure; the
    # single EUP (tanh) is the binding slot, the muls/adds are free VALU filler.
    for t in range(T):
        x_t = x_ref[t]                                       # (8, BL) per-step load
        h = jnp.tanh(x_t * w_ih_v + h * w_hh_v + b_h_v)      # (8, BL)
        y = y + h * w_fc[t]                                  # fold FC head in-loop

    y_ref[...] = y


def choose_layout(n_examples, *, min_block_l=512):
    """Pick the (8, L) packed lane width and the per-grid-step lane block.

    Small problems -> a single block (one grid step, single TC saturated).
    Large problems -> an even number of >= min_block_l-lane blocks so both v7x
    TensorCores get one big step each (also fine on single-TC v5e/v6e).
    """
    l_need = -(-n_examples // 8)                 # lanes per sublane row
    l_pad = max(128, ((l_need + 127) // 128) * 128)
    if l_pad >= 2 * min_block_l:
        n_blocks = 2 * max(1, l_pad // (2 * min_block_l))
        block_l = ((-(-l_pad // n_blocks) + 127) // 128) * 128
        n_blocks = -(-l_pad // block_l)
        if n_blocks % 2:
            n_blocks += 1                        # keep an even count for 2-TC chips
        l_pad = n_blocks * block_l
    else:
        block_l = l_pad
        n_blocks = 1
    return l_pad, block_l, n_blocks


def pack_examples(x, l_pad):
    """(N, T, 1) or (N, T) -> (T, 8, l_pad): example e -> (sublane e//l_pad, lane e%l_pad).

    One-shot layout transform; in production this lives upstream in the data pipeline,
    not in the per-call hot path.
    """
    x_nt = x.reshape(x.shape[0], x.shape[1]).astype(jnp.float32)  # (N, T)
    n, t = x_nt.shape
    x_full = jnp.zeros((8 * l_pad, t), jnp.float32).at[:n].set(x_nt)
    return jnp.transpose(x_full).reshape(t, 8, l_pad)


def unpack_outputs(y_packed, n_examples):
    """(8, l_pad) -> (N, 1), dropping padded examples."""
    return y_packed.reshape(-1)[:n_examples].reshape(n_examples, 1)


def rnn_net_forward_packed(x_packed, w_ih, w_hh, b_h, w_fc, b_fc, *, block_l):
    """x_packed: (T, 8, L) lane/sublane-dense examples (L multiple of block_l).
    w_ih/w_hh: (1,1); b_h: (1,1) = b_ih + b_hh; w_fc: (T,1); b_fc: (1,1).
    Returns packed y of shape (8, L).
    """
    T, S, L = x_packed.shape
    assert S == 8 and block_l % 128 == 0 and L % block_l == 0
    n_blocks = L // block_l

    # All scalar parameters packed into one small SMEM-resident array.
    params = jnp.concatenate([
        w_ih.reshape(-1), w_hh.reshape(-1), b_h.reshape(-1),
        b_fc.reshape(-1), w_fc.reshape(-1),
    ]).astype(jnp.float32)                                   # (4 + T,)

    return pl.pallas_call(
        rnn_net_kernel,
        out_shape=jax.ShapeDtypeStruct((8, L), jnp.float32),
        grid=(n_blocks,),
        in_specs=[
            pl.BlockSpec(memory_space=pltpu.MemorySpace.SMEM),      # params (scalars)
            pl.BlockSpec((T, 8, block_l), lambda i: (0, 0, i)),     # x  (T, 8, BL)
        ],
        out_specs=pl.BlockSpec((8, block_l), lambda i: (0, i)),     # y  (8, BL)
        compiler_params=pltpu.CompilerParams(
            dimension_semantics=("parallel",)),                     # shard over TCs
    )(params, x_packed)


def rnn_net_forward(x, w_ih, w_hh, b_h, w_fc, b_fc):
    """Convenience end-to-end path for (N, T, 1) inputs with zero initial hidden state."""
    N = x.shape[0]
    l_pad, block_l, _ = choose_layout(N)
    x_packed = pack_examples(x, l_pad)
    y_packed = rnn_net_forward_packed(x_packed, w_ih, w_hh, b_h, w_fc, b_fc,
                                      block_l=block_l)
    return unpack_outputs(y_packed, N)


def rnn_net_reference(x, w_ih, w_hh, b_h, w_fc, b_fc):
    """Pure-JAX reference mirroring PyTorch nn.RNN(tanh, batch_first, h0=0) + Linear."""
    N, T, I = x.shape
    h = jnp.zeros((N, w_hh.shape[0]), dtype=jnp.float32)
    outs = []
    for t in range(T):
        h = jnp.tanh(x[:, t, :] @ w_ih + h @ w_hh + b_h)
        outs.append(h)
    hs = jnp.concatenate(outs, axis=-1)       # (N, T*H), H=1 so order matches flatten
    return hs @ w_fc + b_fc


if __name__ == "__main__":
    # Module-implied sizes: input_size=1, hidden_size=1, seq_len=6, output_size=1.
    # Batch the federated workload: 4 clients x batch_size=100 examples each folded
    # into a single call (N = 400 -> one (T, 8, 128) block).
    NUM_CLIENTS, BATCH, T, I, H, O = 4, 100, 6, 1, 1, 1
    N = NUM_CLIENTS * BATCH

    key = jax.random.PRNGKey(0)
    kx, k1, k2, k3, k4, k5, k6 = jax.random.split(key, 7)

    # Deterministic init (uniform(-1/sqrt(H), 1/sqrt(H)), like PyTorch nn.RNN / Linear).
    bound = 1.0 / np.sqrt(H)
    x = jax.random.normal(kx, (N, T, I), dtype=jnp.float32)
    w_ih = jax.random.uniform(k1, (I, H), minval=-bound, maxval=bound, dtype=jnp.float32)
    w_hh = jax.random.uniform(k2, (H, H), minval=-bound, maxval=bound, dtype=jnp.float32)
    b_ih = jax.random.uniform(k3, (1, H), minval=-bound, maxval=bound, dtype=jnp.float32)
    b_hh = jax.random.uniform(k4, (1, H), minval=-bound, maxval=bound, dtype=jnp.float32)
    b_h = b_ih + b_hh
    fc_bound = 1.0 / np.sqrt(T * H)
    w_fc = jax.random.uniform(k5, (T * H, O), minval=-fc_bound, maxval=fc_bound, dtype=jnp.float32)
    b_fc = jax.random.uniform(k6, (1, O), minval=-fc_bound, maxval=fc_bound, dtype=jnp.float32)

    y = rnn_net_forward(x, w_ih, w_hh, b_h, w_fc, b_fc)
    y = jax.block_until_ready(y)

    y_ref = rnn_net_reference(x, w_ih, w_hh, b_h, w_fc, b_fc)
    np.testing.assert_allclose(np.asarray(y), np.asarray(y_ref), rtol=1e-5, atol=1e-5)

    # TODO(synk): the reptile meta-training averaging and file-system Testing()
    # logic are host-side orchestration with no kernel equivalent; only the RNNNet
    # forward hot path (batched over all clients' examples) is implemented here.
    print("KERNEL_OK")
</pallas_src>

<mosaic_0001>
module attributes {stable_mosaic.version = 11 : i64} {
  func.func @rnn_net_kernel(%arg0: i32, %arg1: memref<10xf32, #tpu.memory_space<smem>>, %arg2: memref<6x8x128xf32, #tpu.memory_space<vmem>>, %arg3: memref<8x128xf32, #tpu.memory_space<vmem>>) attributes {dimension_semantics = [#tpu.dimension_semantics<parallel>], iteration_bounds = array<i64: 1>, scalar_prefetch = 0 : i64, scratch_operands = 0 : i64, tpu.core_type = #tpu.core_type<tc>, window_params = [{transform_indices = @transform_0, window_bounds = array<i64: 10>}, {transform_indices = @transform_1, window_bounds = array<i64: 6, 8, 128>}, {transform_indices = @transform_2, window_bounds = array<i64: 8, 128>}]} {
    %c0 = arith.constant 0 : index
    %0 = memref.load %arg1[%c0] : memref<10xf32, #tpu.memory_space<smem>>
    %c1 = arith.constant 1 : index
    %1 = memref.load %arg1[%c1] : memref<10xf32, #tpu.memory_space<smem>>
    %c2 = arith.constant 2 : index
    %2 = memref.load %arg1[%c2] : memref<10xf32, #tpu.memory_space<smem>>
    %c3 = arith.constant 3 : index
    %3 = memref.load %arg1[%c3] : memref<10xf32, #tpu.memory_space<smem>>
    %c4 = arith.constant 4 : index
    %4 = memref.load %arg1[%c4] : memref<10xf32, #tpu.memory_space<smem>>
    %c5 = arith.constant 5 : index
    %5 = memref.load %arg1[%c5] : memref<10xf32, #tpu.memory_space<smem>>
    %c6 = arith.constant 6 : index
    %6 = memref.load %arg1[%c6] : memref<10xf32, #tpu.memory_space<smem>>
    %c7 = arith.constant 7 : index
    %7 = memref.load %arg1[%c7] : memref<10xf32, #tpu.memory_space<smem>>
    %c8 = arith.constant 8 : index
    %8 = memref.load %arg1[%c8] : memref<10xf32, #tpu.memory_space<smem>>
    %c9 = arith.constant 9 : index
    %9 = memref.load %arg1[%c9] : memref<10xf32, #tpu.memory_space<smem>>
    %10 = vector.broadcast %0 : f32 to vector<8x128xf32>
    %11 = vector.broadcast %1 : f32 to vector<8x128xf32>
    %12 = vector.broadcast %2 : f32 to vector<8x128xf32>
    %cst = arith.constant 0.000000e+00 : f32
    %13 = vector.broadcast %cst : f32 to vector<8x128xf32>
    %14 = vector.broadcast %3 : f32 to vector<8x128xf32>
    %c0_0 = arith.constant 0 : index
    %c0_1 = arith.constant 0 : index
    %c0_2 = arith.constant 0 : index
    %15 = vector.load %arg2[%c0_0, %c0_1, %c0_2] : memref<6x8x128xf32, #tpu.memory_space<vmem>>, vector<1x8x128xf32>
    %16 = vector.shape_cast %15 : vector<1x8x128xf32> to vector<8x128xf32>
    %17 = arith.mulf %16, %10 : vector<8x128xf32>
    %18 = arith.mulf %13, %11 : vector<8x128xf32>
    %19 = arith.addf %17, %18 : vector<8x128xf32>
    %20 = arith.addf %19, %12 : vector<8x128xf32>
    %21 = math.tanh %20 : vector<8x128xf32>
    %22 = vector.broadcast %4 : f32 to vector<8x128xf32>
    %23 = arith.mulf %21, %22 : vector<8x128xf32>
    %24 = arith.addf %14, %23 : vector<8x128xf32>
    %c1_3 = arith.constant 1 : index
    %c0_4 = arith.constant 0 : index
    %c0_5 = arith.constant 0 : index
    %25 = vector.load %arg2[%c1_3, %c0_4, %c0_5] : memref<6x8x128xf32, #tpu.memory_space<vmem>>, vector<1x8x128xf32>
    %26 = vector.shape_cast %25 : vector<1x8x128xf32> to vector<8x128xf32>
    %27 = arith.mulf %26, %10 : vector<8x128xf32>
    %28 = arith.mulf %21, %11 : vector<8x128xf32>
    %29 = arith.addf %27, %28 : vector<8x128xf32>
    %30 = arith.addf %29, %12 : vector<8x128xf32>
    %31 = math.tanh %30 : vector<8x128xf32>
    %32 = vector.broadcast %5 : f32 to vector<8x128xf32>
    %33 = arith.mulf %31, %32 : vector<8x128xf32>
    %34 = arith.addf %24, %33 : vector<8x128xf32>
    %c2_6 = arith.constant 2 : index
    %c0_7 = arith.constant 0 : index
    %c0_8 = arith.constant 0 : index
    %35 = vector.load %arg2[%c2_6, %c0_7, %c0_8] : memref<6x8x128xf32, #tpu.memory_space<vmem>>, vector<1x8x128xf32>
    %36 = vector.shape_cast %35 : vector<1x8x128xf32> to vector<8x128xf32>
    %37 = arith.mulf %36, %10 : vector<8x128xf32>
    %38 = arith.mulf %31, %11 : vector<8x128xf32>
    %39 = arith.addf %37, %38 : vector<8x128xf32>
    %40 = arith.addf %39, %12 : vector<8x128xf32>
    %41 = math.tanh %40 : vector<8x128xf32>
    %42 = vector.broadcast %6 : f32 to vector<8x128xf32>
    %43 = arith.mulf %41, %42 : vector<8x128xf32>
    %44 = arith.addf %34, %43 : vector<8x128xf32>
    %c3_9 = arith.constant 3 : index
    %c0_10 = arith.constant 0 : index
    %c0_11 = arith.constant 0 : index
    %45 = vector.load %arg2[%c3_9, %c0_10, %c0_11] : memref<6x8x128xf32, #tpu.memory_space<vmem>>, vector<1x8x128xf32>
    %46 = vector.shape_cast %45 : vector<1x8x128xf32> to vector<8x128xf32>
    %47 = arith.mulf %46, %10 : vector<8x128xf32>
    %48 = arith.mulf %41, %11 : vector<8x128xf32>
    %49 = arith.addf %47, %48 : vector<8x128xf32>
    %50 = arith.addf %49, %12 : vector<8x128xf32>
    %51 = math.tanh %50 : vector<8x128xf32>
    %52 = vector.broadcast %7 : f32 to vector<8x128xf32>
    %53 = arith.mulf %51, %52 : vector<8x128xf32>
    %54 = arith.addf %44, %53 : vector<8x128xf32>
    %c4_12 = arith.constant 4 : index
    %c0_13 = arith.constant 0 : index
    %c0_14 = arith.constant 0 : index
    %55 = vector.load %arg2[%c4_12, %c0_13, %c0_14] : memref<6x8x128xf32, #tpu.memory_space<vmem>>, vector<1x8x128xf32>
    %56 = vector.shape_cast %55 : vector<1x8x128xf32> to vector<8x128xf32>
    %57 = arith.mulf %56, %10 : vector<8x128xf32>
    %58 = arith.mulf %51, %11 : vector<8x128xf32>
    %59 = arith.addf %57, %58 : vector<8x128xf32>
    %60 = arith.addf %59, %12 : vector<8x128xf32>
    %61 = math.tanh %60 : vector<8x128xf32>
    %62 = vector.broadcast %8 : f32 to vector<8x128xf32>
    %63 = arith.mulf %61, %62 : vector<8x128xf32>
    %64 = arith.addf %54, %63 : vector<8x128xf32>
    %c5_15 = arith.constant 5 : index
    %c0_16 = arith.constant 0 : index
    %c0_17 = arith.constant 0 : index
    %65 = vector.load %arg2[%c5_15, %c0_16, %c0_17] : memref<6x8x128xf32, #tpu.memory_space<vmem>>, vector<1x8x128xf32>
    %66 = vector.shape_cast %65 : vector<1x8x128xf32> to vector<8x128xf32>
    %67 = arith.mulf %66, %10 : vector<8x128xf32>
    %68 = arith.mulf %61, %11 : vector<8x128xf32>
    %69 = arith.addf %67, %68 : vector<8x128xf32>
    %70 = arith.addf %69, %12 : vector<8x128xf32>
    %71 = math.tanh %70 : vector<8x128xf32>
    %72 = vector.broadcast %9 : f32 to vector<8x128xf32>
    %73 = arith.mulf %71, %72 : vector<8x128xf32>
    %74 = arith.addf %64, %73 : vector<8x128xf32>
    %c0_18 = arith.constant 0 : index
    %c0_19 = arith.constant 0 : index
    %75 = vector.load %arg3[%c0_18, %c0_19] : memref<8x128xf32, #tpu.memory_space<vmem>>, vector<8x128xf32>
    tpu.vector_store %arg3[%c0_18, %c0_19], %74 {strides = array<i32>} : memref<8x128xf32, #tpu.memory_space<vmem>>, vector<8x128xf32>,
    return
  }
  func.func @transform_0(%arg0: i32) -> i32 {
    %c0_i32 = arith.constant 0 : i32
    %c0_i32_0 = arith.constant 0 : i32
    return %c0_i32 : i32
  }
  func.func @transform_1(%arg0: i32) -> (i32, i32, i32) {
    %c0_i32 = arith.constant 0 : i32
    %c0_i32_0 = arith.constant 0 : i32
    %c0_i32_1 = arith.constant 0 : i32
    return %c0_i32, %c0_i32_0, %arg0 : i32, i32, i32
  }
  func.func @transform_2(%arg0: i32) -> (i32, i32) {
    %c0_i32 = arith.constant 0 : i32
    %c0_i32_0 = arith.constant 0 : i32
    return %c0_i32, %arg0 : i32, i32
  }
}

</mosaic_0001>

<llo_original>
// kernel: tpu_custom_call.1
$region0: #{tpu_custom_call.1}
  #allocation0 [shape = 'u32[]', space=smem, size = 0x4, offset = 0x4, fixed_abs, tag = 'smem constant byte address 0x4 - core index']
  #allocation1 [shape = 'u32[72,128]{1,0:T(1,128)}', space=vmem, size = 0x9000, scoped, tag = 'internal scratch']
  %s0 = inlined_call_operand.hbm [shape: f32[10], index: 0, kind: input, shape index: {}]
  %s1 = inlined_call_operand.hbm [shape: f32[6,8,128], index: 1, kind: input, shape index: {}]
  %s2 = inlined_call_operand.hbm [shape: f32[8,128], index: 2, kind: output, shape index: {}]
  %s3 = sld [smem:[#allocation0]]
  $region26: #{tpu_custom_call.1} parent=0
    _
  %s5 = ssub.s32 1, %s3
  %s6 = scalar_select 0, %s5, %s3
  $region1: #{tpu_custom_call.1} parent=0
    #allocation2 [shape = 'u8[512]{0}', space=smem, size = 0x200, scoped, tag = 'input window, operand 0, single buffered']
    #allocation3 [shape = 's32[1]{0}', space=sflag, size = 0x4, scoped, tag = 'scoped memory for tpu_custom_call.1']
    #allocation4 [shape = 's32[1]{0}', space=sflag, size = 0x4, scoped, tag = 'scoped memory for tpu_custom_call.1']
    #allocation5 [shape = 's32[1]{0}', space=sflag, size = 0x4, scoped, tag = 'scoped memory for tpu_custom_call.1']
    #allocation6 [shape = 'u8[24576]{0}', space=vmem, size = 0x6000, scoped, tag = 'input window, operand 1, single buffered']
    #allocation7 [shape = 'u8[4096]{0}', space=vmem, size = 0x1000, scoped, tag = 'output window, operand 0, single buffered']
    %7 = vsyncpa [#allocation5], 0
    %8 = vsyncpa [#allocation3], 0
    %9 = vsyncpa [#allocation4], 0
    // Predicated region
    $region2: #{tpu_custom_call.1} parent=1 // pred_check
      _
    $region3: #{tpu_custom_call.1} parent=1 // pred_check_branch
      %11 = sbr.rel (0) target = $region5
    $region4: #{tpu_custom_call.1} parent=1 // pred_region
      %13 = vsyncadd [#allocation5], 0
      %s15 = sshll.u32 %s0, 4
      %s16 = int_to_ptr.hbm [resolvable:$true] %s15
      %18 = dma.hbm_to_smem %s16, 16, [#allocation2], [#allocation5]
    $region5: #{tpu_custom_call.1} parent=1 // pred_fallthru
      _
    // Predicated region
    $region6: #{tpu_custom_call.1} parent=1 // pred_check
      _
    $region7: #{tpu_custom_call.1} parent=1 // pred_check_branch
      %20 = sbr.rel (0) target = $region9
    $region8: #{tpu_custom_call.1} parent=1 // pred_region
      %22 = vsyncadd [#allocation3], 0
      %s23 = sshll.u32 %s1, 4
      %s24 = int_to_ptr.hbm [resolvable:$true] %s23
      %s25 = sshll.u32 [#allocation6], 4
      %s26 = int_to_ptr.vmem [resolvable:$true] %s25
      %31 = dma.hbm_to_vmem [thread:$0]  %s24, 768, %s26, [#allocation3], 128, 128, 8
    $region9: #{tpu_custom_call.1} parent=1 // pred_fallthru
      _
    // Predicated region
    $region10: #{tpu_custom_call.1} parent=1 // pred_check
      _
    $region11: #{tpu_custom_call.1} parent=1 // pred_check_branch
      %33 = sbr.rel (0) target = $region13
    $region12: #{tpu_custom_call.1} parent=1 // pred_region
      %35 = dma.done [#allocation5], 16
    $region13: #{tpu_custom_call.1} parent=1 // pred_fallthru
      _
    // Predicated region
    $region14: #{tpu_custom_call.1} parent=1 // pred_check
      _
    $region15: #{tpu_custom_call.1} parent=1 // pred_check_branch
      %37 = sbr.rel (0) target = $region17
    $region16: #{tpu_custom_call.1} parent=1 // pred_region
      %39 = dma.done [#allocation3], 768
    $region17: #{tpu_custom_call.1} parent=1 // pred_fallthru
      _
    %40 = sfence
    %s41 = sld [smem:[#allocation2]]
    %s42 = sld [smem:[#allocation2 + $0x1]]
    %s43 = sld [smem:[#allocation2 + $0x2]]
    %s44 = sld [smem:[#allocation2 + $0x3]]
    %s45 = sld [smem:[#allocation2 + $0x4]]
    %s46 = sld [smem:[#allocation2 + $0x5]]
    %s47 = sld [smem:[#allocation2 + $0x6]]
    %s48 = sld [smem:[#allocation2 + $0x7]]
    %s49 = sld [smem:[#allocation2 + $0x8]]
    %s50 = sld [smem:[#allocation2 + $0x9]]
    %v51 = vstv %s41
    %v52 = vstv %s42
    %v53 = vstv %s43
    %v54 = vstv %s44
    %v55 = vld [vmem:[#allocation6] sm:$0xff]
    %v56 = vmul.f32 %v55, %v51
    %v57 = vmul.f32 %v52, 0.0
    %v58 = vadd.f32 %v56, %v57
    %v59 = vadd.f32 %v58, %v53
    %v60 = vtanh.pop %v59
    %v61 = vstv %s45
    %v62 = vmul.f32 %v60, %v61
    %v63 = vadd.f32 %v54, %v62
    %s64 = scalar_lea.vmem [#allocation6], 8
    %v65 = vld [vmem:[%s64] sm:$0xff]
    %v66 = vmul.f32 %v65, %v51
    %v67 = vmul.f32 %v60, %v52
    %v68 = vadd.f32 %v66, %v67
    %v69 = vadd.f32 %v68, %v53
    %v70 = vtanh.pop %v69
    %v71 = vstv %s46
    %v72 = vmul.f32 %v70, %v71
    %v73 = vadd.f32 %v63, %v72
    %s74 = scalar_lea.vmem [#allocation6], 16
    %v75 = vld [vmem:[%s74] sm:$0xff]
    %v76 = vmul.f32 %v75, %v51
    %v77 = vmul.f32 %v70, %v52
    %v78 = vadd.f32 %v76, %v77
    %v79 = vadd.f32 %v78, %v53
    %v80 = vtanh.pop %v79
    %v81 = vstv %s47
    %v82 = vmul.f32 %v80, %v81
    %v83 = vadd.f32 %v73, %v82
    %s84 = scalar_lea.vmem [#allocation6], 24
    %v85 = vld [vmem:[%s84] sm:$0xff]
    %v86 = vmul.f32 %v85, %v51
    %v87 = vmul.f32 %v80, %v52
    %v88 = vadd.f32 %v86, %v87
    %v89 = vadd.f32 %v88, %v53
    %v90 = vtanh.pop %v89
    %v91 = vstv %s48
    %v92 = vmul.f32 %v90, %v91
    %v93 = vadd.f32 %v83, %v92
    %s94 = scalar_lea.vmem [#allocation6], 32
    %v95 = vld [vmem:[%s94] sm:$0xff]
    %v96 = vmul.f32 %v95, %v51
    %v97 = vmul.f32 %v90, %v52
    %v98 = vadd.f32 %v96, %v97
    %v99 = vadd.f32 %v98, %v53
    %v100 = vtanh.pop %v99
    %v101 = vstv %s49
    %v102 = vmul.f32 %v100, %v101
    %v103 = vadd.f32 %v93, %v102
    %s104 = scalar_lea.vmem [#allocation6], 40
    %v105 = vld [vmem:[%s104] sm:$0xff]
    %v106 = vmul.f32 %v105, %v51
    %v107 = vmul.f32 %v100, %v52
    %v108 = vadd.f32 %v106, %v107
    %v109 = vadd.f32 %v108, %v53
    %v110 = vtanh.pop %v109
    %v111 = vstv %s50
    %v112 = vmul.f32 %v110, %v111
    %v113 = vadd.f32 %v103, %v112
    %114 = vst [vmem:[#allocation7] sm:$0xff] %v113
    // Predicated region
    $region18: #{tpu_custom_call.1} parent=1 // pred_check
      _
    $region19: #{tpu_custom_call.1} parent=1 // pred_check_branch
      %116 = sbr.rel (0) target = $region21
    $region20: #{tpu_custom_call.1} parent=1 // pred_region
      %118 = vsyncadd [#allocation4], 0
      %s120 = sshll.u32 [#allocation7], 4
      %s121 = int_to_ptr.vmem [resolvable:$true] %s120
      %s122 = sshll.u32 %s2, 4
      %s123 = int_to_ptr.hbm [resolvable:$true] %s122
      %125 = dma.vmem_to_hbm [thread:$0]  %s121, 128, %s123, [#allocation4]
    $region21: #{tpu_custom_call.1} parent=1 // pred_fallthru
      _
    // Predicated region
    $region22: #{tpu_custom_call.1} parent=1 // pred_check
      _
    $region23: #{tpu_custom_call.1} parent=1 // pred_check_branch
      %127 = sbr.rel (0) target = $region25
    $region24: #{tpu_custom_call.1} parent=1 // pred_region
      %129 = dma.done [#allocation4], 128
    $region25: #{tpu_custom_call.1} parent=1 // pred_fallthru
      _
    %130 = vsyncpa [#allocation3], 1
    %131 = vsyncpa [#allocation4], 1
    %132 = vsyncpa [#allocation5], 1

</llo_original>
